<compile_context>
chip_gen: v7x
topology: tpu7x:2x2x1
jax: 0.10.0
libtpu: 0.0.40
codegen_flags: <defaults>
</compile_context>

<pallas_src>
import math

import jax
import jax.numpy as jnp
from jax.experimental import pallas as pl
from jax.experimental.pallas import tpu as pltpu


def _linear_sigmoid_kernel(x_ref, w_ref, b_ref, o_ref):
    # x_ref : (TB, Kp) f32  tile, streamed over the packed batch axis
    # w_ref : (Kp, Np) bf16 tile, VMEM-resident (block-diag W^T when packed)
    # b_ref : (1,  Np) f32  tile, VMEM-resident
    # o_ref : (TB, Np) f32  tile
    x = x_ref[...].astype(jnp.bfloat16)            # in-kernel cast (free under HBM slack)
    y = jnp.dot(x, w_ref[...], preferred_element_type=jnp.float32)
    y = y + b_ref[...]                             # broadcast (1, Np) over (TB, Np)
    o_ref[...] = jax.nn.sigmoid(y).astype(o_ref.dtype)   # exact sigmoid (EUP)


def downstream_net(x, weight, bias, *, target_step_bytes=4 * 1024 * 1024):
    """Forward pass of DownstreamNet: sigmoid(x @ weight.T + bias).

    x:      (B, E) float32
    weight: (C, E) float32  (PyTorch nn.Linear layout)
    bias:   (C,)   float32
    returns (B, C) float32
    """
    B, E = x.shape
    C, E_w = weight.shape
    assert E == E_w and bias.shape == (C,)

    # ---- generation-aware VMEM budget (64 MiB v7x, 128 MiB v5e/v6e) ----------
    try:
        vmem_cap = pltpu.get_tpu_info().vmem_capacity_bytes
    except Exception:
        vmem_cap = 64 * 1024 * 1024
    vmem_budget = int(0.6 * vmem_cap)              # ~38 MiB on v7x, ~77 MiB on v5e/v6e

    # ---- lane-dense packing: G samples per slab so Np = G*C is a multiple of 128
    G = 128 // math.gcd(C, 128)
    wt = weight.T.astype(jnp.bfloat16)             # (E, C): tiny one-time copy
    if G > 1 and (G * E) * (G * C) * 2 > 4 * 1024 * 1024:
        G = 1                                      # block-diag weight too big -> plain layout
    if G > 1:
        w_in = jnp.kron(jnp.eye(G, dtype=wt.dtype), wt)            # (G*E, G*C) block-diag
        b_in = jnp.tile(bias.astype(jnp.float32), G).reshape(1, G * C)
    else:
        w_in = wt                                                  # (E, C)
        b_in = bias.astype(jnp.float32).reshape(1, C)

    B_pad = ((B + G - 1) // G) * G
    x_p = x if B_pad == B else jnp.pad(x, ((0, B_pad - B), (0, 0)))
    num_slabs = B_pad // G
    Kp, Np = G * E, G * C
    x_p = x_p.reshape(num_slabs, Kp)               # contiguous reshape (free)

    # ---- batch-slab tile: multi-MiB per grid step, VMEM-safe, >=2 steps if possible
    row_bytes = Kp * 4 + Np * 4                    # f32 x slab + f32 out slab
    tb = max(1, min(num_slabs, target_step_bytes // row_bytes))

    def _tile_bytes(t):                            # double-buffered tiles + resident w, b
        return 2 * t * row_bytes + 2 * (w_in.size * 2 + Np * 4)

    while tb > 8 and _tile_bytes(tb) > vmem_budget:
        tb //= 2
    if num_slabs >= 16 and tb > num_slabs // 2:
        tb = num_slabs // 2                        # keep both v7x TensorCores busy
    if tb < num_slabs:
        tb = max(8, (tb // 8) * 8)                 # sublane-aligned when actually tiling
    else:
        tb = num_slabs

    grid = (pl.cdiv(num_slabs, tb),)
    vmem_limit = int(min(vmem_budget, max(_tile_bytes(tb) + (2 << 20), 8 << 20)))

    out_packed = pl.pallas_call(
        _linear_sigmoid_kernel,
        out_shape=jax.ShapeDtypeStruct((num_slabs, Np), jnp.float32),
        grid=grid,
        in_specs=[
            pl.BlockSpec((tb, Kp), lambda i: (i, 0)),   # x: streamed over batch slabs
            pl.BlockSpec((Kp, Np), lambda i: (0, 0)),   # weight: VMEM-resident
            pl.BlockSpec((1, Np), lambda i: (0, 0)),    # bias:   VMEM-resident
        ],
        out_specs=pl.BlockSpec((tb, Np), lambda i: (i, 0)),
        compiler_params=pltpu.CompilerParams(
            dimension_semantics=("parallel",),          # shard slabs over TCs (v7x)
            vmem_limit_bytes=vmem_limit,
        ),
    )(x_p, w_in, b_in)

    return out_packed.reshape(B_pad, C)[:B]            # contiguous unpack + tail slice


if __name__ == "__main__":
    # Small shapes consistent with the module's forward: x is (batch, embed_dim)
    batch, embed_dim, num_classes = 8, 32, 8

    key = jax.random.PRNGKey(0)
    kx, kw, kb = jax.random.split(key, 3)

    # Deterministic init (PyTorch nn.Linear default: U(-1/sqrt(E), 1/sqrt(E)))
    bound = 1.0 / jnp.sqrt(jnp.float32(embed_dim))
    weight = jax.random.uniform(kw, (num_classes, embed_dim), jnp.float32,
                                minval=-bound, maxval=bound)
    bias = jax.random.uniform(kb, (num_classes,), jnp.float32,
                              minval=-bound, maxval=bound)
    x = jax.random.normal(kx, (batch, embed_dim), jnp.float32)

    out = jax.block_until_ready(downstream_net(x, weight, bias))
    assert out.shape == (batch, num_classes)

    # Reference: full-f32 PyTorch-equivalent forward. Only bf16 rounding of the
    # matmul operands separates the kernel from this (exact sigmoid, f32 acc).
    ref = jax.nn.sigmoid(x @ weight.T + bias)
    err = float(jnp.max(jnp.abs(out - ref)))
    assert jnp.allclose(out, ref, atol=5e-3, rtol=0.0), f"max abs err {err}"

    print("KERNEL_OK")
</pallas_src>

<mosaic_0001>
module attributes {stable_mosaic.version = 11 : i64} {
  func.func @_linear_sigmoid_kernel(%arg0: i32, %arg1: memref<1x512xf32, #tpu.memory_space<vmem>>, %arg2: memref<512x128xbf16, #tpu.memory_space<vmem>>, %arg3: memref<1x128xf32, #tpu.memory_space<vmem>>, %arg4: memref<1x128xf32, #tpu.memory_space<vmem>>) attributes {dimension_semantics = [#tpu.dimension_semantics<parallel>], iteration_bounds = array<i64: 1>, scalar_prefetch = 0 : i64, scratch_operands = 0 : i64, tpu.core_type = #tpu.core_type<tc>, window_params = [{transform_indices = @transform_0, window_bounds = array<i64: 1, 512>}, {pipeline_mode = #tpu.pipeline_mode<synchronous>, transform_indices = @transform_1, window_bounds = array<i64: 512, 128>}, {pipeline_mode = #tpu.pipeline_mode<synchronous>, transform_indices = @transform_2, window_bounds = array<i64: 1, 128>}, {transform_indices = @transform_3, window_bounds = array<i64: 1, 128>}]} {
    %c0 = arith.constant 0 : index
    %c0_0 = arith.constant 0 : index
    %0 = vector.load %arg1[%c0, %c0_0] : memref<1x512xf32, #tpu.memory_space<vmem>>, vector<1x512xf32>
    %1 = arith.truncf %0 : vector<1x512xf32> to vector<1x512xbf16>
    %c0_1 = arith.constant 0 : index
    %c0_2 = arith.constant 0 : index
    %2 = vector.load %arg2[%c0_1, %c0_2] : memref<512x128xbf16, #tpu.memory_space<vmem>>, vector<512x128xbf16>
    %cst = arith.constant dense<0.000000e+00> : vector<1x128xf32>
    %3 = tpu.matmul %1, %2, %cst {dimension_numbers = #tpu.dot_dimension_numbers<[1], [0], [0], [1], [0, 0, 1, 1], [], []>} : vector<1x512xbf16>, vector<512x128xbf16>, vector<1x128xf32> -> vector<1x128xf32>
    %c0_3 = arith.constant 0 : index
    %c0_4 = arith.constant 0 : index
    %4 = vector.load %arg3[%c0_3, %c0_4] : memref<1x128xf32, #tpu.memory_space<vmem>>, vector<1x128xf32>
    %5 = arith.addf %3, %4 : vector<1x128xf32>
    %6 = arith.negf %5 : vector<1x128xf32>
    %7 = math.exp %6 : vector<1x128xf32>
    %cst_5 = arith.constant 1.000000e+00 : f32
    %8 = vector.broadcast %cst_5 : f32 to vector<1x128xf32>
    %9 = arith.addf %8, %7 : vector<1x128xf32>
    %10 = arith.divf %8, %9 : vector<1x128xf32>
    %c0_6 = arith.constant 0 : index
    %c0_7 = arith.constant 0 : index
    %11 = vector.load %arg4[%c0_6, %c0_7] : memref<1x128xf32, #tpu.memory_space<vmem>>, vector<1x128xf32>
    tpu.vector_store %arg4[%c0_6, %c0_7], %10 {strides = array<i32>} : memref<1x128xf32, #tpu.memory_space<vmem>>, vector<1x128xf32>,
    return
  }
  func.func @transform_0(%arg0: i32) -> (i32, i32) {
    %c0_i32 = arith.constant 0 : i32
    %c0_i32_0 = arith.constant 0 : i32
    return %arg0, %c0_i32 : i32, i32
  }
  func.func @transform_1(%arg0: i32) -> (i32, i32) {
    %c0_i32 = arith.constant 0 : i32
    %c0_i32_0 = arith.constant 0 : i32
    %c0_i32_1 = arith.constant 0 : i32
    return %c0_i32, %c0_i32_0 : i32, i32
  }
  func.func @transform_2(%arg0: i32) -> (i32, i32) {
    %c0_i32 = arith.constant 0 : i32
    %c0_i32_0 = arith.constant 0 : i32
    %c0_i32_1 = arith.constant 0 : i32
    return %c0_i32, %c0_i32_0 : i32, i32
  }
  func.func @transform_3(%arg0: i32) -> (i32, i32) {
    %c0_i32 = arith.constant 0 : i32
    %c0_i32_0 = arith.constant 0 : i32
    return %arg0, %c0_i32 : i32, i32
  }
}

</mosaic_0001>

<llo_original>
// kernel: tpu_custom_call.1
$region0: #{tpu_custom_call.1}
  #allocation0 [shape = 'u32[]', space=smem, size = 0x4, offset = 0x4, fixed_abs, tag = 'smem constant byte address 0x4 - core index']
  #allocation1 [shape = 'u32[144,128]{1,0:T(1,128)}', space=vmem, size = 0x12000, scoped, tag = 'internal scratch']
  %s0 = inlined_call_operand.hbm [shape: f32[1,512], index: 0, kind: input, shape index: {}]
  %s1 = inlined_call_operand.hbm [shape: bf16[512,128], index: 1, kind: input, shape index: {}]
  %s2 = inlined_call_operand.vmem [shape: f32[1,128], index: 2, kind: input, shape index: {}]
  %s3 = inlined_call_operand.hbm [shape: f32[1,128], index: 3, kind: output, shape index: {}]
  %s4 = sld [smem:[#allocation0]]
  $region30: #{tpu_custom_call.1} parent=0
    _
  %s6 = ssub.s32 1, %s4
  %s7 = scalar_select 0, %s6, %s4
  $region1: #{tpu_custom_call.1} parent=0
    #allocation2 [shape = 'u8[2048]{0}', space=vmem, size = 0x800, scoped, tag = 'input window, operand 0, single buffered']
    #allocation3 [shape = 's32[1]{0}', space=sflag, size = 0x4, scoped, tag = 'scoped memory for tpu_custom_call.1']
    #allocation4 [shape = 's32[1]{0}', space=sflag, size = 0x4, scoped, tag = 'scoped memory for tpu_custom_call.1']
    #allocation5 [shape = 'u8[131072]{0}', space=vmem, size = 0x20000, scoped, tag = 'input window, operand 1, single buffered']
    #allocation6 [shape = 's32[1]{0}', space=sflag, size = 0x4, scoped, tag = 'scoped memory for tpu_custom_call.1']
    #allocation7 [shape = 'u8[512]{0}', space=vmem, size = 0x400, scoped, tag = 'output window, operand 0, single buffered']
    %8 = vsyncpa [#allocation3], 0
    %9 = vsyncpa [#allocation6], 0
    %10 = vsyncpa [#allocation4], 0
    // Predicated region
    $region2: #{tpu_custom_call.1} parent=1 // pred_check
      _
    $region3: #{tpu_custom_call.1} parent=1 // pred_check_branch
      %12 = sbr.rel (0) target = $region5
    $region4: #{tpu_custom_call.1} parent=1 // pred_region
      %s14 = ssub.s32 64, 64
      %15 = vsyncadd [#allocation3], %s14
      %s17 = sshll.u32 [#allocation2], 4
      %s18 = int_to_ptr.vmem [resolvable:$true] %s17
      %20 = dma.hbm_to_vmem [thread:$0]  %s0, 64, %s18, [#allocation3]
    $region5: #{tpu_custom_call.1} parent=1 // pred_fallthru
      _
    // Predicated region
    $region6: #{tpu_custom_call.1} parent=1 // pred_check
      _
    $region7: #{tpu_custom_call.1} parent=1 // pred_check_branch
      %22 = sbr.rel (0) target = $region9
    $region8: #{tpu_custom_call.1} parent=1 // pred_region
      %s24 = ssub.s32 4096, 4096
      %25 = vsyncadd [#allocation6], %s24
      %s26 = sshll.u32 [#allocation5], 4
      %s27 = int_to_ptr.vmem [resolvable:$true] %s26
      %32 = dma.hbm_to_vmem [thread:$0]  %s1, 4096, %s27, [#allocation6], 64, 64, 4
    $region9: #{tpu_custom_call.1} parent=1 // pred_fallthru
      _
    // Predicated region
    $region10: #{tpu_custom_call.1} parent=1 // pred_check
      _
    $region11: #{tpu_custom_call.1} parent=1 // pred_check_branch
      %34 = sbr.rel (0) target = $region13
    $region12: #{tpu_custom_call.1} parent=1 // pred_region
      _
    $region13: #{tpu_custom_call.1} parent=1 // pred_fallthru
      _
    // Predicated region
    $region14: #{tpu_custom_call.1} parent=1 // pred_check
      _
    $region15: #{tpu_custom_call.1} parent=1 // pred_check_branch
      %36 = sbr.rel (0) target = $region17
    $region16: #{tpu_custom_call.1} parent=1 // pred_region
      %37 = dma.done [#allocation3], 64
    $region17: #{tpu_custom_call.1} parent=1 // pred_fallthru
      _
    // Predicated region
    $region18: #{tpu_custom_call.1} parent=1 // pred_check
      _
    $region19: #{tpu_custom_call.1} parent=1 // pred_check_branch
      %39 = sbr.rel (0) target = $region21
    $region20: #{tpu_custom_call.1} parent=1 // pred_region
      %40 = dma.done [#allocation6], 4096
    $region21: #{tpu_custom_call.1} parent=1 // pred_fallthru
      _
    %v42 = vld [vmem:[#allocation2] sm:$0xf]
    %v44 = vlaneseq
    %v45 = vshrl.u32 %v44, 7
    %v46 = vsub.s32 0, %v45
    %v47 = vrot.slane %v42, %v46
    %v48 = vlaneseq
    %v49 = vshrl.u32 %v48, 7
    %v50 = vsub.s32 1, %v49
    %v51 = vrot.slane %v42, %v50
    %v52 = vlaneseq
    %v53 = vshrl.u32 %v52, 7
    %v54 = vsub.s32 2, %v53
    %v55 = vrot.slane %v42, %v54
    %v56 = vlaneseq
    %v57 = vshrl.u32 %v56, 7
    %v58 = vsub.s32 3, %v57
    %v59 = vrot.slane %v42, %v58
    %v64 = vpack.c.bf16 %v47, %v47
    %v65 = vpack.c.bf16 %v51, %v51
    %v66 = vpack.c.bf16 %v55, %v55
    %v67 = vpack.c.bf16 %v59, %v59
    %v68 = vld [vmem:[#allocation5] sm:$0xf]
    %v69 = vld [vmem:[#allocation5 + $0x4] sm:$0xf]
    %v70 = vld [vmem:[#allocation5 + $0x8] sm:$0xf]
    %v71 = vld [vmem:[#allocation5 + $0xc] sm:$0xf]
    %v72 = vld [vmem:[#allocation5 + $0x10] sm:$0xf]
    %v73 = vld [vmem:[#allocation5 + $0x14] sm:$0xf]
    %v74 = vld [vmem:[#allocation5 + $0x18] sm:$0xf]
    %v75 = vld [vmem:[#allocation5 + $0x1c] sm:$0xf]
    %v76 = vld [vmem:[#allocation5 + $0x20] sm:$0xf]
    %v77 = vld [vmem:[#allocation5 + $0x24] sm:$0xf]
    %v78 = vld [vmem:[#allocation5 + $0x28] sm:$0xf]
    %v79 = vld [vmem:[#allocation5 + $0x2c] sm:$0xf]
    %v80 = vld [vmem:[#allocation5 + $0x30] sm:$0xf]
    %v81 = vld [vmem:[#allocation5 + $0x34] sm:$0xf]
    %v82 = vld [vmem:[#allocation5 + $0x38] sm:$0xf]
    %v83 = vld [vmem:[#allocation5 + $0x3c] sm:$0xf]
    %v84 = vld [vmem:[#allocation5 + $0x40] sm:$0xf]
    %v85 = vld [vmem:[#allocation5 + $0x44] sm:$0xf]
    %v86 = vld [vmem:[#allocation5 + $0x48] sm:$0xf]
    %v87 = vld [vmem:[#allocation5 + $0x4c] sm:$0xf]
    %v88 = vld [vmem:[#allocation5 + $0x50] sm:$0xf]
    %v89 = vld [vmem:[#allocation5 + $0x54] sm:$0xf]
    %v90 = vld [vmem:[#allocation5 + $0x58] sm:$0xf]
    %v91 = vld [vmem:[#allocation5 + $0x5c] sm:$0xf]
    %v92 = vld [vmem:[#allocation5 + $0x60] sm:$0xf]
    %v93 = vld [vmem:[#allocation5 + $0x64] sm:$0xf]
    %v94 = vld [vmem:[#allocation5 + $0x68] sm:$0xf]
    %v95 = vld [vmem:[#allocation5 + $0x6c] sm:$0xf]
    %v96 = vld [vmem:[#allocation5 + $0x70] sm:$0xf]
    %v97 = vld [vmem:[#allocation5 + $0x74] sm:$0xf]
    %v98 = vld [vmem:[#allocation5 + $0x78] sm:$0xf]
    %v99 = vld [vmem:[#allocation5 + $0x7c] sm:$0xf]
    %v100 = vld [vmem:[#allocation5 + $0x80] sm:$0xf]
    %v101 = vld [vmem:[#allocation5 + $0x84] sm:$0xf]
    %v102 = vld [vmem:[#allocation5 + $0x88] sm:$0xf]
    %v103 = vld [vmem:[#allocation5 + $0x8c] sm:$0xf]
    %v104 = vld [vmem:[#allocation5 + $0x90] sm:$0xf]
    %v105 = vld [vmem:[#allocation5 + $0x94] sm:$0xf]
    %v106 = vld [vmem:[#allocation5 + $0x98] sm:$0xf]
    %v107 = vld [vmem:[#allocation5 + $0x9c] sm:$0xf]
    %v108 = vld [vmem:[#allocation5 + $0xa0] sm:$0xf]
    %v109 = vld [vmem:[#allocation5 + $0xa4] sm:$0xf]
    %v110 = vld [vmem:[#allocation5 + $0xa8] sm:$0xf]
    %v111 = vld [vmem:[#allocation5 + $0xac] sm:$0xf]
    %v112 = vld [vmem:[#allocation5 + $0xb0] sm:$0xf]
    %v113 = vld [vmem:[#allocation5 + $0xb4] sm:$0xf]
    %v114 = vld [vmem:[#allocation5 + $0xb8] sm:$0xf]
    %v115 = vld [vmem:[#allocation5 + $0xbc] sm:$0xf]
    %v116 = vld [vmem:[#allocation5 + $0xc0] sm:$0xf]
    %v117 = vld [vmem:[#allocation5 + $0xc4] sm:$0xf]
    %v118 = vld [vmem:[#allocation5 + $0xc8] sm:$0xf]
    %v119 = vld [vmem:[#allocation5 + $0xcc] sm:$0xf]
    %v120 = vld [vmem:[#allocation5 + $0xd0] sm:$0xf]
    %v121 = vld [vmem:[#allocation5 + $0xd4] sm:$0xf]
    %v122 = vld [vmem:[#allocation5 + $0xd8] sm:$0xf]
    %v123 = vld [vmem:[#allocation5 + $0xdc] sm:$0xf]
    %v124 = vld [vmem:[#allocation5 + $0xe0] sm:$0xf]
    %v125 = vld [vmem:[#allocation5 + $0xe4] sm:$0xf]
    %v126 = vld [vmem:[#allocation5 + $0xe8] sm:$0xf]
    %v127 = vld [vmem:[#allocation5 + $0xec] sm:$0xf]
    %v128 = vld [vmem:[#allocation5 + $0xf0] sm:$0xf]
    %v129 = vld [vmem:[#allocation5 + $0xf4] sm:$0xf]
    %v130 = vld [vmem:[#allocation5 + $0xf8] sm:$0xf]
    %v131 = vld [vmem:[#allocation5 + $0xfc] sm:$0xf]
    %v132 = vld [vmem:[%s2] sm:$0x1]
    %v197 = vunpack.c.l.b16 %v68
    %v198 = vunpack.c.l.b16 %v69
    %v199 = vunpack.c.l.b16 %v70
    %v200 = vunpack.c.l.b16 %v71
    %v201 = vunpack.c.l.b16 %v72
    %v202 = vunpack.c.l.b16 %v73
    %v203 = vunpack.c.l.b16 %v74
    %v204 = vunpack.c.l.b16 %v75
    %v205 = vunpack.c.l.b16 %v76
    %v206 = vunpack.c.l.b16 %v77
    %v207 = vunpack.c.l.b16 %v78
    %v208 = vunpack.c.l.b16 %v79
    %v209 = vunpack.c.l.b16 %v80
    %v210 = vunpack.c.l.b16 %v81
    %v211 = vunpack.c.l.b16 %v82
    %v212 = vunpack.c.l.b16 %v83
    %v213 = vunpack.c.l.b16 %v84
    %v214 = vunpack.c.l.b16 %v85
    %v215 = vunpack.c.l.b16 %v86
    %v216 = vunpack.c.l.b16 %v87
    %v217 = vunpack.c.l.b16 %v88
    %v218 = vunpack.c.l.b16 %v89
    %v219 = vunpack.c.l.b16 %v90
    %v220 = vunpack.c.l.b16 %v91
    %v221 = vunpack.c.l.b16 %v92
    %v222 = vunpack.c.l.b16 %v93
    %v223 = vunpack.c.l.b16 %v94
    %v224 = vunpack.c.l.b16 %v95
    %v225 = vunpack.c.l.b16 %v96
    %v226 = vunpack.c.l.b16 %v97
    %v227 = vunpack.c.l.b16 %v98
    %v228 = vunpack.c.l.b16 %v99
    %v229 = vunpack.c.l.b16 %v100
    %v230 = vunpack.c.l.b16 %v101
    %v231 = vunpack.c.l.b16 %v102
    %v232 = vunpack.c.l.b16 %v103
    %v233 = vunpack.c.l.b16 %v104
    %v234 = vunpack.c.l.b16 %v105
    %v235 = vunpack.c.l.b16 %v106
    %v236 = vunpack.c.l.b16 %v107
    %v237 = vunpack.c.l.b16 %v108
    %v238 = vunpack.c.l.b16 %v109
    %v239 = vunpack.c.l.b16 %v110
    %v240 = vunpack.c.l.b16 %v111
    %v241 = vunpack.c.l.b16 %v112
    %v242 = vunpack.c.l.b16 %v113
    %v243 = vunpack.c.l.b16 %v114
    %v244 = vunpack.c.l.b16 %v115
    %v245 = vunpack.c.l.b16 %v116
    %v246 = vunpack.c.l.b16 %v117
    %v247 = vunpack.c.l.b16 %v118
    %v248 = vunpack.c.l.b16 %v119
    %v249 = vunpack.c.l.b16 %v120
    %v250 = vunpack.c.l.b16 %v121
    %v251 = vunpack.c.l.b16 %v122
    %v252 = vunpack.c.l.b16 %v123
    %v253 = vunpack.c.l.b16 %v124
    %v254 = vunpack.c.l.b16 %v125
    %v255 = vunpack.c.l.b16 %v126
    %v256 = vunpack.c.l.b16 %v127
    %v257 = vunpack.c.l.b16 %v128
    %v258 = vunpack.c.l.b16 %v129
    %v259 = vunpack.c.l.b16 %v130
    %v260 = vunpack.c.l.b16 %v131
    %v261 = vpack.c.b16 %v198, %v197
    %v262 = vpack.c.b16 %v200, %v199
    %v263 = vpack.c.b16 %v202, %v201
    %v264 = vpack.c.b16 %v204, %v203
    %v265 = vpack.c.b16 %v206, %v205
    %v266 = vpack.c.b16 %v208, %v207
    %v267 = vpack.c.b16 %v210, %v209
    %v268 = vpack.c.b16 %v212, %v211
    %v269 = vpack.c.b16 %v214, %v213
    %v270 = vpack.c.b16 %v216, %v215
    %v271 = vpack.c.b16 %v218, %v217
    %v272 = vpack.c.b16 %v220, %v219
    %v273 = vpack.c.b16 %v222, %v221
    %v274 = vpack.c.b16 %v224, %v223
    %v275 = vpack.c.b16 %v226, %v225
    %v276 = vpack.c.b16 %v228, %v227
    %v277 = vpack.c.b16 %v230, %v229
    %v278 = vpack.c.b16 %v232, %v231
    %v279 = vpack.c.b16 %v234, %v233
    %v280 = vpack.c.b16 %v236, %v235
    %v281 = vpack.c.b16 %v238, %v237
    %v282 = vpack.c.b16 %v240, %v239
    %v283 = vpack.c.b16 %v242, %v241
    %v284 = vpack.c.b16 %v244, %v243
    %v285 = vpack.c.b16 %v246, %v245
    %v286 = vpack.c.b16 %v248, %v247
    %v287 = vpack.c.b16 %v250, %v249
    %v288 = vpack.c.b16 %v252, %v251
    %v289 = vpack.c.b16 %v254, %v253
    %v290 = vpack.c.b16 %v256, %v255
    %v291 = vpack.c.b16 %v258, %v257
    %v292 = vpack.c.b16 %v260, %v259
    %325 = vmatprep.subr.bf16.mxu0 0
    %326 = vmatpush1.bf16.msra.mxu0 %v261
    %327 = vmatprep.subr.bf16.mxu0 0
    %328 = vmatpush1.bf16.msra.mxu0 %v262
    %329 = vmatprep.subr.bf16.mxu0 0
    %330 = vmatpush1.bf16.msra.mxu0 %v263
    %331 = vmatprep.subr.bf16.mxu0 0
    %332 = vmatpush1.bf16.msra.mxu0 %v264
    %333 = vmatprep.subr.bf16.mxu0 0
    %334 = vmatpush1.bf16.msra.mxu0 %v265
    %335 = vmatprep.subr.bf16.mxu0 0
    %336 = vmatpush1.bf16.msra.mxu0 %v266
    %337 = vmatprep.subr.bf16.mxu0 0
    %338 = vmatpush1.bf16.msra.mxu0 %v267
    %339 = vmatprep.subr.bf16.mxu0 0
    %340 = vmatpush1.bf16.msra.mxu0 %v268
    %341 = vmatprep.subr.bf16.mxu0 0
    %342 = vmatpush1.bf16.msra.mxu0 %v269
    %343 = vmatprep.subr.bf16.mxu0 0
    %344 = vmatpush1.bf16.msra.mxu0 %v270
    %345 = vmatprep.subr.bf16.mxu0 0
    %346 = vmatpush1.bf16.msra.mxu0 %v271
    %347 = vmatprep.subr.bf16.mxu0 0
    %348 = vmatpush1.bf16.msra.mxu0 %v272
    %349 = vmatprep.subr.bf16.mxu0 0
    %350 = vmatpush1.bf16.msra.mxu0 %v273
    %351 = vmatprep.subr.bf16.mxu0 0
    %352 = vmatpush1.bf16.msra.mxu0 %v274
    %353 = vmatprep.subr.bf16.mxu0 0
    %354 = vmatpush1.bf16.msra.mxu0 %v275
    %355 = vmatprep.subr.bf16.mxu0 0
    %356 = vmatpush1.bf16.msra.mxu0 %v276
    %357 = vmatprep.mubr.bf16.mxu0 %v65
    %358 = vmatmul.mubr.bf16.gmra.mrb[0].mxu0 %v64
    %v359 = vpop.f32.mrb[0].mxu0
    %v360 = vadd.f32 %v132, %v359
    %v361 = vpop.f32.mrb[0].mxu0
    %v362 = vpop.f32.mrb[0].mxu0
    %v363 = vpop.f32.mrb[0].mxu0
    %364 = vdwg.mxu0
    %365 = vmatprep.subr.bf16.mxu0 0
    %366 = vmatpush1.bf16.msra.mxu0 %v277
    %367 = vmatprep.subr.bf16.mxu0 0
    %368 = vmatpush1.bf16.msra.mxu0 %v278
    %369 = vmatprep.subr.bf16.mxu0 0
    %370 = vmatpush1.bf16.msra.mxu0 %v279
    %371 = vmatprep.subr.bf16.mxu0 0
    %372 = vmatpush1.bf16.msra.mxu0 %v280
    %373 = vmatprep.subr.bf16.mxu0 0
    %374 = vmatpush1.bf16.msra.mxu0 %v281
    %375 = vmatprep.subr.bf16.mxu0 0
    %376 = vmatpush1.bf16.msra.mxu0 %v282
    %377 = vmatprep.subr.bf16.mxu0 0
    %378 = vmatpush1.bf16.msra.mxu0 %v283
    %379 = vmatprep.subr.bf16.mxu0 0
    %380 = vmatpush1.bf16.msra.mxu0 %v284
    %381 = vmatprep.subr.bf16.mxu0 0
    %382 = vmatpush1.bf16.msra.mxu0 %v285
    %383 = vmatprep.subr.bf16.mxu0 0
    %384 = vmatpush1.bf16.msra.mxu0 %v286
    %385 = vmatprep.subr.bf16.mxu0 0
    %386 = vmatpush1.bf16.msra.mxu0 %v287
    %387 = vmatprep.subr.bf16.mxu0 0
    %388 = vmatpush1.bf16.msra.mxu0 %v288
    %389 = vmatprep.subr.bf16.mxu0 0
    %390 = vmatpush1.bf16.msra.mxu0 %v289
    %391 = vmatprep.subr.bf16.mxu0 0
    %392 = vmatpush1.bf16.msra.mxu0 %v290
    %393 = vmatprep.subr.bf16.mxu0 0
    %394 = vmatpush1.bf16.msra.mxu0 %v291
    %395 = vmatprep.subr.bf16.mxu0 0
    %396 = vmatpush1.bf16.msra.mxu0 %v292
    %397 = vmatprep.mubr.bf16.mxu0 %v67
    %398 = vmatmul.mubr.bf16.gmra.mrb[0].mxu0 %v66
    %v399 = vpop.f32.mrb[0].mxu0
    %v400 = vadd.f32 %v360, %v399
    %v401 = vpop.f32.mrb[0].mxu0
    %v402 = vpop.f32.mrb[0].mxu0
    %v403 = vpop.f32.mrb[0].mxu0
    %404 = vdwg.mxu0
    %v405 = vxor.u32 %v400, 2147483648
    %v406 = vmul.f32 %v405, 1.442695
    %v407 = vpow.pop %v406
    %v408 = vadd.f32 %v407, 1.0
    %v409 = vrcp.pop %v408
    %v410 = vmul.f32 1.0, %v409
    %411 = vst [vmem:[#allocation7] sm:$0x1] %v410
    // Predicated region
    $region22: #{tpu_custom_call.1} parent=1 // pred_check
      _
    $region23: #{tpu_custom_call.1} parent=1 // pred_check_branch
      %413 = sbr.rel (0) target = $region25
    $region24: #{tpu_custom_call.1} parent=1 // pred_region
      %s415 = ssub.s32 16, 16
      %416 = vsyncadd [#allocation4], %s415
      %s418 = sshll.u32 [#allocation7], 4
      %s419 = int_to_ptr.vmem [resolvable:$true] %s418
      %421 = dma.vmem_to_hbm [thread:$0]  %s419, 16, %s3, [#allocation4]
    $region25: #{tpu_custom_call.1} parent=1 // pred_fallthru
      _
    // Predicated region
    $region26: #{tpu_custom_call.1} parent=1 // pred_check
      _
    $region27: #{tpu_custom_call.1} parent=1 // pred_check_branch
      %423 = sbr.rel (0) target = $region29
    $region28: #{tpu_custom_call.1} parent=1 // pred_region
      %424 = dma.done [#allocation4], 16
    $region29: #{tpu_custom_call.1} parent=1 // pred_fallthru
      _
    %425 = vsyncpa [#allocation3], 1
    %426 = vsyncpa [#allocation6], 1
    %427 = vsyncpa [#allocation4], 1

</llo_original>
